<compile_context>
chip_gen: v7x
topology: tpu7x:2x2x1
jax: 0.10.0
libtpu: 0.0.40
codegen_flags: <defaults>
</compile_context>

<pallas_src>
import functools
import inspect

import jax
import jax.numpy as jnp
from jax.experimental import pallas as pl
from jax.experimental.pallas import tpu as pltpu

IGNORE_INDEX = -100
_MIB = 1024 * 1024


def _round_up(x, m):
    return (x + m - 1) // m * m


def _tpu_vmem_capacity():
    """Per-core VMEM capacity in bytes; conservative fallback if unavailable."""
    try:
        return int(pltpu.get_tpu_info().vmem_capacity_bytes)
    except Exception:
        return 64 * _MIB  # v7x-per-TC sized fallback (safe on every generation)


def _supports_pipeline_mode():
    """True if pl.BlockSpec accepts pipeline_mode=pl.Buffered(n)."""
    if not hasattr(pl, "Buffered"):
        return False
    try:
        return "pipeline_mode" in inspect.signature(pl.BlockSpec).parameters
    except (TypeError, ValueError):
        return False


def _pick_tiles(n, V, H, itemsize, tm, tv):
    """Generation-aware tile / VMEM-budget selection."""
    vmem_cap = _tpu_vmem_capacity()
    big_vmem = vmem_cap >= 100 * _MIB  # v5e/v6e: 128 MiB; v7x: 64 MiB per TC

    if tm is None:
        # Weight-stream arithmetic intensity == tm flops/byte; stay above the
        # HBM roofline crossover (~650 v6e, ~620/TC v7x, ~240 v5e).
        tm = 1024 if big_vmem else 768
    if tv is None:
        # Multiple of 256 -> full MXU occupancy on v6e/v7x (2x256x256 MXUs).
        tv = 1024 if big_vmem else 512

    row_align = 16 if itemsize < 4 else 8  # bf16 packs two rows per sublane
    n_rows = _round_up(n, row_align)

    tm = max(row_align, min(_round_up(tm, row_align), n_rows))
    # Megacore (2-TC chips, i.e. the small-VMEM generation): make sure there
    # are at least two row tiles so both TensorCores get work.
    if (not big_vmem) and n_rows > row_align and pl.cdiv(n_rows, tm) < 2:
        tm = _round_up(pl.cdiv(n_rows, 2), row_align)

    tv = max(128, min(_round_up(tv, 128), _round_up(V, 128)))

    # Leave headroom for Mosaic internal scratch (critical on v7x's 64 MiB).
    headroom = (28 if big_vmem else 16) * _MIB
    budget = max(24 * _MIB, vmem_cap - headroom)

    # Triple-buffer the dominant weight DMA stream only where VMEM is ample
    # and there are enough vocab steps for it to matter.
    wbuf = 3 if (big_vmem and _supports_pipeline_mode()
                 and pl.cdiv(V, tv) >= 4) else 2

    def est(tm_, tv_, wbuf_):
        return (2 * tm_ * H * itemsize          # double-buffered hidden tiles
                + wbuf_ * tv_ * H * itemsize    # streamed weight tiles
                + 6 * tm_ * tv_ * 4             # live [tm, tv] f32 temporaries
                + 2 * _MIB)                     # labels / outputs / misc

    # Shrink tv first (amortization loss only), then tm (roofline loss).
    while est(tm, tv, wbuf) > budget and tv > 256:
        tv = max(256, tv // 2)
    while est(tm, tv, wbuf) > budget and tm > 256:
        tm = max(256, _round_up(tm // 2, row_align))

    return tm, tv, wbuf, int(budget)


def _lm_ce_kernel(h_ref, w_ref, lbl_ref, loss_ref, cnt_ref,
                  m_acc, l_acc, c_acc, *, tv, vocab_size, mask_tail):
    """One (row_tile, vocab_tile) step of fused lm-head + cross-entropy."""
    j = pl.program_id(1)

    @pl.when(j == 0)
    def _():
        m_acc[...] = jnp.full_like(m_acc, -jnp.inf)   # running max
        l_acc[...] = jnp.zeros_like(l_acc)            # running sum-exp
        c_acc[...] = jnp.zeros_like(c_acc)            # target-class logit

    h = h_ref[...]                      # [tm, H]
    w = w_ref[...]                      # [tv, H]
    # [tm, H] . [tv, H]^T -> [tm, tv], f32 accumulation on the MXU (NT form,
    # no weight transpose materialized).
    logits = jax.lax.dot_general(
        h, w, dimension_numbers=(((1,), (1,)), ((), ())),
        preferred_element_type=jnp.float32)

    local_col = jax.lax.broadcasted_iota(jnp.int32, logits.shape, 1)

    if mask_tail:
        # Only compiled in when V % tv != 0.  Every vocab tile contains at
        # least one real column (cdiv grid), so a tile is never fully -inf.
        col = local_col + j * tv
        logits = jnp.where(col < vocab_size, logits, -jnp.inf)

    # Online logsumexp update.
    m_prev = m_acc[...]
    m_new = jnp.maximum(m_prev, jnp.max(logits, axis=-1, keepdims=True))
    alpha = jnp.exp(m_prev - m_new)
    l_acc[...] = alpha * l_acc[...] + jnp.sum(jnp.exp(logits - m_new),
                                              axis=-1, keepdims=True)
    m_acc[...] = m_new

    # The target logit lives in exactly one vocab tile; accumulate it.
    labels = lbl_ref[...]                                   # [tm, 1] i32
    onehot = local_col == (labels - j * tv)                 # [tm, tv]
    c_acc[...] = c_acc[...] + jnp.sum(jnp.where(onehot, logits, 0.0),
                                      axis=-1, keepdims=True)

    @pl.when(j == pl.num_programs(1) - 1)
    def _():
        valid = labels != IGNORE_INDEX                      # [tm, 1]
        lse = m_acc[...] + jnp.log(l_acc[...])
        loss_ref[...] = jnp.where(valid, lse - c_acc[...], 0.0)
        cnt_ref[...] = valid.astype(jnp.float32)


@functools.partial(jax.jit,
                   static_argnames=("tm", "tv", "wbuf", "vmem_limit",
                                    "mask_tail"))
def _lm_loss_impl(hidden_states, labels, weight, *, tm, tv, wbuf,
                  vmem_limit, mask_tail):
    S, B, H = hidden_states.shape
    V = weight.shape[0]
    n = S * B

    # Free reshape: rows in (s, b) order; row r = s*B + b is hidden[s, b].
    h_rows = hidden_states.reshape(n, H)

    # Matching labels: row r = s*B + b pairs with labels[b, s+1]; the last
    # sequence position has no next token -> ignore_index.
    shifted = jnp.concatenate(
        [labels[:, 1:].astype(jnp.int32),
         jnp.full((B, 1), IGNORE_INDEX, dtype=jnp.int32)], axis=1)  # [B, S]
    lbl_rows = shifted.T.reshape(n, 1)

    n_pad = pl.cdiv(n, tm) * tm
    if n_pad != n:
        # Pad activations with zeros so the ragged last row tile never reads
        # past the array; padded rows are ignore_index and self-mask.
        h_rows = jnp.pad(h_rows, ((0, n_pad - n), (0, 0)))
        lbl_rows = jnp.pad(lbl_rows, ((0, n_pad - n), (0, 0)),
                           constant_values=IGNORE_INDEX)

    grid = (n_pad // tm, pl.cdiv(V, tv))
    assert (grid[1] - 1) * tv < V  # last vocab tile always has real columns

    w_spec_kwargs = {}
    if wbuf > 2:
        w_spec_kwargs["pipeline_mode"] = pl.Buffered(wbuf)
    w_spec = pl.BlockSpec((tv, H), lambda i, j: (j, 0), **w_spec_kwargs)

    kernel = functools.partial(_lm_ce_kernel, tv=tv, vocab_size=V,
                               mask_tail=mask_tail)

    loss_rows, valid_rows = pl.pallas_call(
        kernel,
        out_shape=(jax.ShapeDtypeStruct((n_pad, 1), jnp.float32),
                   jax.ShapeDtypeStruct((n_pad, 1), jnp.float32)),
        grid_spec=pltpu.PrefetchScalarGridSpec(
            num_scalar_prefetch=0,
            grid=grid,
            in_specs=[
                pl.BlockSpec((tm, H), lambda i, j: (i, 0)),  # hidden tile, resident over j
                w_spec,                                      # streamed weight tile
                pl.BlockSpec((tm, 1), lambda i, j: (i, 0)),  # labels tile
            ],
            out_specs=[
                pl.BlockSpec((tm, 1), lambda i, j: (i, 0)),  # per-row loss
                pl.BlockSpec((tm, 1), lambda i, j: (i, 0)),  # per-row valid
            ],
            scratch_shapes=[
                pltpu.VMEM((tm, 1), jnp.float32),
                pltpu.VMEM((tm, 1), jnp.float32),
                pltpu.VMEM((tm, 1), jnp.float32),
            ],
        ),
        compiler_params=pltpu.CompilerParams(
            dimension_semantics=("parallel", "arbitrary"),
            vmem_limit_bytes=vmem_limit),
    )(h_rows, weight, lbl_rows)

    loss = (jnp.sum(loss_rows) / jnp.sum(valid_rows)).astype(hidden_states.dtype)
    return loss


def lm_pipe_layer_loss(hidden_states, labels, weight, *, tm=None, tv=None):
    """hidden_states: [S, B, H]; labels: [B, S] int; weight: [V, H].

    Tile sizes default to generation-aware values (tm=1024/tv=1024 on 128 MiB
    VMEM chips, tm=768/tv=512 on 64 MiB chips) and are shrunk automatically to
    fit the per-generation VMEM budget.
    """
    S, B, H = hidden_states.shape
    V = weight.shape[0]
    n = S * B
    itemsize = jnp.dtype(hidden_states.dtype).itemsize

    tm_, tv_, wbuf, vmem_limit = _pick_tiles(n, V, H, itemsize, tm, tv)
    mask_tail = (V % tv_) != 0

    return _lm_loss_impl(hidden_states, labels, weight,
                         tm=tm_, tv=tv_, wbuf=wbuf,
                         vmem_limit=vmem_limit, mask_tail=mask_tail)


def _reference_loss(hidden_states, labels, weight):
    """Pure-JAX reference mirroring the PyTorch module."""
    logits = jnp.einsum("sbh,vh->sbv", hidden_states, weight)
    logits = jnp.transpose(logits, (1, 0, 2)).astype(jnp.float32)
    shift_logits = logits[:, :-1, :].reshape(-1, weight.shape[0])
    shift_labels = labels[:, 1:].reshape(-1)
    valid = shift_labels != IGNORE_INDEX
    lse = jax.nn.logsumexp(shift_logits, axis=-1)
    correct = jnp.take_along_axis(
        shift_logits, jnp.clip(shift_labels, 0)[:, None], axis=-1)[:, 0]
    per_row = jnp.where(valid, lse - correct, 0.0)
    return (per_row.sum() / valid.sum()).astype(hidden_states.dtype)


if __name__ == "__main__":
    # Small shapes: seq=8, batch=2, hidden=32, vocab=128
    S, B, H, V = 8, 2, 32, 128
    key = jax.random.PRNGKey(0)
    k_h, k_w, k_l = jax.random.split(key, 3)

    hidden_states = jax.random.normal(k_h, (S, B, H), dtype=jnp.float32)
    weight = (jax.random.normal(k_w, (V, H), dtype=jnp.float32)
              / jnp.sqrt(jnp.float32(H)))
    labels = jax.random.randint(k_l, (B, S), 0, V, dtype=jnp.int32)
    labels = labels.at[0, 3].set(IGNORE_INDEX)   # exercise ignore_index=-100

    loss = lm_pipe_layer_loss(hidden_states, labels, weight)
    loss = jax.block_until_ready(loss)

    ref = _reference_loss(hidden_states, labels, weight)
    assert jnp.allclose(loss, ref, rtol=1e-5, atol=1e-5), (loss, ref)

    print("KERNEL_OK")
</pallas_src>

<mosaic_0001>
module attributes {stable_mosaic.version = 11 : i64} {
  func.func @_lm_ce_kernel(%arg0: i32, %arg1: i32, %arg2: memref<8x32xf32, #tpu.memory_space<vmem>>, %arg3: memref<128x32xf32, #tpu.memory_space<vmem>>, %arg4: memref<8x1xi32, #tpu.memory_space<vmem>>, %arg5: memref<8x1xf32, #tpu.memory_space<vmem>>, %arg6: memref<8x1xf32, #tpu.memory_space<vmem>>, %arg7: memref<8x1xf32, #tpu.memory_space<vmem>>, %arg8: memref<8x1xf32, #tpu.memory_space<vmem>>, %arg9: memref<8x1xf32, #tpu.memory_space<vmem>>) attributes {dimension_semantics = [#tpu.dimension_semantics<parallel>, #tpu.dimension_semantics<arbitrary>], iteration_bounds = array<i64: 2, 1>, scalar_prefetch = 0 : i64, scratch_operands = 3 : i64, tpu.core_type = #tpu.core_type<tc>, window_params = [{transform_indices = @transform_0, window_bounds = array<i64: 8, 32>}, {transform_indices = @transform_1, window_bounds = array<i64: 128, 32>}, {transform_indices = @transform_2, window_bounds = array<i64: 8, 1>}, {transform_indices = @transform_3, window_bounds = array<i64: 8, 1>}, {transform_indices = @transform_4, window_bounds = array<i64: 8, 1>}]} {
    %c0_i32 = arith.constant 0 : i32
    %0 = arith.cmpi eq, %arg1, %c0_i32 : i32
    %1 = arith.extui %0 : i1 to i32
    %c0_i32_0 = arith.constant 0 : i32
    %2 = arith.cmpi ne, %1, %c0_i32_0 : i32
    scf.if %2 {
      %cst_24 = arith.constant 0xFF800000 : f32
      %39 = vector.broadcast %cst_24 : f32 to vector<8x1xf32>
      %c0_25 = arith.constant 0 : index
      %c0_26 = arith.constant 0 : index
      %40 = vector.load %arg7[%c0_25, %c0_26] : memref<8x1xf32, #tpu.memory_space<vmem>>, vector<8x1xf32>
      tpu.vector_store %arg7[%c0_25, %c0_26], %39 {strides = array<i32>} : memref<8x1xf32, #tpu.memory_space<vmem>>, vector<8x1xf32>,
      %cst_27 = arith.constant 0.000000e+00 : f32
      %41 = vector.broadcast %cst_27 : f32 to vector<8x1xf32>
      %c0_28 = arith.constant 0 : index
      %c0_29 = arith.constant 0 : index
      %42 = vector.load %arg8[%c0_28, %c0_29] : memref<8x1xf32, #tpu.memory_space<vmem>>, vector<8x1xf32>
      tpu.vector_store %arg8[%c0_28, %c0_29], %41 {strides = array<i32>} : memref<8x1xf32, #tpu.memory_space<vmem>>, vector<8x1xf32>,
      %cst_30 = arith.constant 0.000000e+00 : f32
      %43 = vector.broadcast %cst_30 : f32 to vector<8x1xf32>
      %c0_31 = arith.constant 0 : index
      %c0_32 = arith.constant 0 : index
      %44 = vector.load %arg9[%c0_31, %c0_32] : memref<8x1xf32, #tpu.memory_space<vmem>>, vector<8x1xf32>
      tpu.vector_store %arg9[%c0_31, %c0_32], %43 {strides = array<i32>} : memref<8x1xf32, #tpu.memory_space<vmem>>, vector<8x1xf32>,
    } else {
    }
    %c0 = arith.constant 0 : index
    %c0_1 = arith.constant 0 : index
    %3 = vector.load %arg2[%c0, %c0_1] : memref<8x32xf32, #tpu.memory_space<vmem>>, vector<8x32xf32>
    %c0_2 = arith.constant 0 : index
    %c0_3 = arith.constant 0 : index
    %4 = vector.load %arg3[%c0_2, %c0_3] : memref<128x32xf32, #tpu.memory_space<vmem>>, vector<128x32xf32>
    %cst = arith.constant dense<0.000000e+00> : vector<8x128xf32>
    %5 = tpu.matmul %3, %4, %cst {dimension_numbers = #tpu.dot_dimension_numbers<[1], [1], [0], [0], [0, 0, 1, 0], [], []>} : vector<8x32xf32>, vector<128x32xf32>, vector<8x128xf32> -> vector<8x128xf32>
    %6 = tpu.iota {dimensions = array<i32: 1>} : vector<8x128xi32>
    %c0_4 = arith.constant 0 : index
    %c0_5 = arith.constant 0 : index
    %7 = vector.load %arg7[%c0_4, %c0_5] : memref<8x1xf32, #tpu.memory_space<vmem>>, vector<8x1xf32>
    %cst_6 = arith.constant dense<0xFF800000> : vector<8xf32>
    %8 = vector.multi_reduction <maximumf>, %5, %cst_6 [1] : vector<8x128xf32> to vector<8xf32>
    %9 = vector.shape_cast %8 : vector<8xf32> to vector<8x1xf32>
    %10 = arith.maximumf %7, %9 : vector<8x1xf32>
    %11 = arith.subf %7, %10 : vector<8x1xf32>
    %12 = math.exp %11 : vector<8x1xf32>
    %c0_7 = arith.constant 0 : index
    %c0_8 = arith.constant 0 : index
    %13 = vector.load %arg8[%c0_7, %c0_8] : memref<8x1xf32, #tpu.memory_space<vmem>>, vector<8x1xf32>
    %14 = arith.mulf %12, %13 : vector<8x1xf32>
    %15 = vector.broadcast %10 : vector<8x1xf32> to vector<8x128xf32>
    %16 = arith.subf %5, %15 : vector<8x128xf32>
    %17 = math.exp %16 : vector<8x128xf32>
    %cst_9 = arith.constant dense<0.000000e+00> : vector<8xf32>
    %18 = vector.multi_reduction <add>, %17, %cst_9 [1] : vector<8x128xf32> to vector<8xf32>
    %19 = vector.shape_cast %18 : vector<8xf32> to vector<8x1xf32>
    %20 = arith.addf %14, %19 : vector<8x1xf32>
    %c0_10 = arith.constant 0 : index
    %c0_11 = arith.constant 0 : index
    %21 = vector.load %arg8[%c0_10, %c0_11] : memref<8x1xf32, #tpu.memory_space<vmem>>, vector<8x1xf32>
    tpu.vector_store %arg8[%c0_10, %c0_11], %20 {strides = array<i32>} : memref<8x1xf32, #tpu.memory_space<vmem>>, vector<8x1xf32>,
    %c0_12 = arith.constant 0 : index
    %c0_13 = arith.constant 0 : index
    %22 = vector.load %arg7[%c0_12, %c0_13] : memref<8x1xf32, #tpu.memory_space<vmem>>, vector<8x1xf32>
    tpu.vector_store %arg7[%c0_12, %c0_13], %10 {strides = array<i32>} : memref<8x1xf32, #tpu.memory_space<vmem>>, vector<8x1xf32>,
    %c0_14 = arith.constant 0 : index
    %c0_15 = arith.constant 0 : index
    %23 = vector.load %arg4[%c0_14, %c0_15] : memref<8x1xi32, #tpu.memory_space<vmem>>, vector<8x1xi32>
    %c128_i32 = arith.constant 128 : i32
    %24 = arith.muli %arg1, %c128_i32 : i32
    %25 = vector.broadcast %24 : i32 to vector<8x1xi32>
    %26 = arith.subi %23, %25 : vector<8x1xi32>
    %27 = vector.broadcast %26 : vector<8x1xi32> to vector<8x128xi32>
    %28 = arith.cmpi eq, %6, %27 : vector<8x128xi32>
    %c0_16 = arith.constant 0 : index
    %c0_17 = arith.constant 0 : index
    %29 = vector.load %arg9[%c0_16, %c0_17] : memref<8x1xf32, #tpu.memory_space<vmem>>, vector<8x1xf32>
    %cst_18 = arith.constant 0.000000e+00 : f32
    %30 = vector.broadcast %cst_18 : f32 to vector<8x128xf32>
    %31 = arith.select %28, %5, %30 : vector<8x128xi1>, vector<8x128xf32>
    %cst_19 = arith.constant dense<0.000000e+00> : vector<8xf32>
    %32 = vector.multi_reduction <add>, %31, %cst_19 [1] : vector<8x128xf32> to vector<8xf32>
    %33 = vector.shape_cast %32 : vector<8xf32> to vector<8x1xf32>
    %34 = arith.addf %29, %33 : vector<8x1xf32>
    %c0_20 = arith.constant 0 : index
    %c0_21 = arith.constant 0 : index
    %35 = vector.load %arg9[%c0_20, %c0_21] : memref<8x1xf32, #tpu.memory_space<vmem>>, vector<8x1xf32>
    tpu.vector_store %arg9[%c0_20, %c0_21], %34 {strides = array<i32>} : memref<8x1xf32, #tpu.memory_space<vmem>>, vector<8x1xf32>,
    %c0_i32_22 = arith.constant 0 : i32
    %36 = arith.cmpi eq, %arg1, %c0_i32_22 : i32
    %37 = arith.extui %36 : i1 to i32
    %c0_i32_23 = arith.constant 0 : i32
    %38 = arith.cmpi ne, %37, %c0_i32_23 : i32
    scf.if %38 {
      %c-100_i32 = arith.constant -100 : i32
      %39 = vector.broadcast %c-100_i32 : i32 to vector<8x1xi32>
      %40 = arith.cmpi ne, %23, %39 : vector<8x1xi32>
      %c0_24 = arith.constant 0 : index
      %c0_25 = arith.constant 0 : index
      %41 = vector.load %arg7[%c0_24, %c0_25] : memref<8x1xf32, #tpu.memory_space<vmem>>, vector<8x1xf32>
      %c0_26 = arith.constant 0 : index
      %c0_27 = arith.constant 0 : index
      %42 = vector.load %arg8[%c0_26, %c0_27] : memref<8x1xf32, #tpu.memory_space<vmem>>, vector<8x1xf32>
      %43 = math.log %42 : vector<8x1xf32>
      %44 = arith.addf %41, %43 : vector<8x1xf32>
      %c0_28 = arith.constant 0 : index
      %c0_29 = arith.constant 0 : index
      %45 = vector.load %arg9[%c0_28, %c0_29] : memref<8x1xf32, #tpu.memory_space<vmem>>, vector<8x1xf32>
      %46 = arith.subf %44, %45 : vector<8x1xf32>
      %cst_30 = arith.constant 0.000000e+00 : f32
      %47 = vector.broadcast %cst_30 : f32 to vector<8x1xf32>
      %48 = arith.select %40, %46, %47 : vector<8x1xi1>, vector<8x1xf32>
      %c0_31 = arith.constant 0 : index
      %c0_32 = arith.constant 0 : index
      %49 = vector.load %arg5[%c0_31, %c0_32] : memref<8x1xf32, #tpu.memory_space<vmem>>, vector<8x1xf32>
      tpu.vector_store %arg5[%c0_31, %c0_32], %48 {strides = array<i32>} : memref<8x1xf32, #tpu.memory_space<vmem>>, vector<8x1xf32>,
      %50 = arith.extui %40 : vector<8x1xi1> to vector<8x1xi32>
      %51 = arith.sitofp %50 : vector<8x1xi32> to vector<8x1xf32>
      %c0_33 = arith.constant 0 : index
      %c0_34 = arith.constant 0 : index
      %52 = vector.load %arg6[%c0_33, %c0_34] : memref<8x1xf32, #tpu.memory_space<vmem>>, vector<8x1xf32>
      tpu.vector_store %arg6[%c0_33, %c0_34], %51 {strides = array<i32>} : memref<8x1xf32, #tpu.memory_space<vmem>>, vector<8x1xf32>,
    } else {
    }
    return
  }
  func.func @transform_0(%arg0: i32, %arg1: i32) -> (i32, i32) {
    %c0_i32 = arith.constant 0 : i32
    %c0_i32_0 = arith.constant 0 : i32
    return %arg0, %c0_i32 : i32, i32
  }
  func.func @transform_1(%arg0: i32, %arg1: i32) -> (i32, i32) {
    %c0_i32 = arith.constant 0 : i32
    %c0_i32_0 = arith.constant 0 : i32
    return %arg1, %c0_i32 : i32, i32
  }
  func.func @transform_2(%arg0: i32, %arg1: i32) -> (i32, i32) {
    %c0_i32 = arith.constant 0 : i32
    %c0_i32_0 = arith.constant 0 : i32
    return %arg0, %c0_i32 : i32, i32
  }
  func.func @transform_3(%arg0: i32, %arg1: i32) -> (i32, i32) {
    %c0_i32 = arith.constant 0 : i32
    %c0_i32_0 = arith.constant 0 : i32
    return %arg0, %c0_i32 : i32, i32
  }
  func.func @transform_4(%arg0: i32, %arg1: i32) -> (i32, i32) {
    %c0_i32 = arith.constant 0 : i32
    %c0_i32_0 = arith.constant 0 : i32
    return %arg0, %c0_i32 : i32, i32
  }
}

</mosaic_0001>

<llo_original>
// kernel: _lm_loss_impl.1
$region0: #{_lm_loss_impl.1}
  #allocation0 [shape = 'u32[]', space=smem, size = 0x4, offset = 0x4, fixed_abs, tag = 'smem constant byte address 0x4 - core index']
  #allocation1 [shape = 'u32[144,128]{1,0:T(1,128)}', space=vmem, size = 0x12000, scoped, tag = 'internal scratch']
  #allocation2 [shape = 'f32[8,1]{1,0:T(8,128)}', space=vmem, size = 0x1000, scoped, tag = 'scratch operand']
  #allocation3 [shape = 'f32[8,1]{1,0:T(8,128)}', space=vmem, size = 0x1000, scoped, tag = 'scratch operand']
  #allocation4 [shape = 'f32[8,1]{1,0:T(8,128)}', space=vmem, size = 0x1000, scoped, tag = 'scratch operand']
  %s0 = inlined_call_operand.vmem [shape: f32[16,32], index: 0, kind: input, shape index: {}]
  %s1 = inlined_call_operand.vmem [shape: f32[128,32], index: 1, kind: input, shape index: {}]
  %s2 = inlined_call_operand.vmem [shape: s32[16,1], index: 2, kind: input, shape index: {}]
  %s3 = inlined_call_operand.vmem [shape: f32[16,1], index: 3, kind: output, shape index: {0}]
  %s4 = inlined_call_operand.vmem [shape: f32[16,1], index: 4, kind: output, shape index: {1}]
  %5 = xla_tuple %s3, %s4
  %s6 = sld [smem:[#allocation0]]
  $region61: #{_lm_loss_impl.1} parent=0
    _
  %s8 = ssub.s32 1, %s6
  %s9 = scalar_select 0, %s8, %s6
  loop: start=0, step=1, limit=4
  $region2: #{_lm_loss_impl.1} parent=0 // loop_pre_header
    _
  $region3: #{_lm_loss_impl.1} parent=0 // loop_header
    %s11 = sphi 0, %s15
    %p12 = scmp.ge.s32.totalorder %s11, 4
    %s18 = sphi 0, %s30
    %s19 = sphi 0, %s26
    %s20 = sphi 0, %s18
    %s21 = sphi 0, %s19
    %s22 = sphi 0, %s20
    %s23 = sphi 0, %s21
    %s33 = sphi 0, %s35
    %s36 = sphi 0, %s33
    %s37 = sphi 0, %s36
    %s53 = sphi 0, %s37
    %s59 = sphi 0, %s61
    %s62 = sphi 0, %s59
    %s63 = sphi 0, %s62
    %s79 = sphi 0, %s63
    %s85 = sphi 0, %s87
    %s88 = sphi 0, %s85
    %s89 = sphi 0, %s88
    %s105 = sphi 0, %s89
    %s111 = sphi 0, %s113
    %s114 = sphi 0, %s111
    %s115 = sphi 0, %s114
    %s131 = sphi 0, %s115
    %s137 = sphi 0, %s139
    %s140 = sphi 0, %s137
    %s141 = sphi 0, %s140
    %s157 = sphi 0, %s141
  $region4: #{_lm_loss_impl.1} parent=0 // loop_header_branch
    %14 = sbr.rel (%p12) target = $region8
  $region5: #{_lm_loss_impl.1} parent=0 // loop_body
    %s16 = ssub.s32 %s11, 1
    %s17 = ssub.s32 %s11, 2
    %s24 = sadd.s32 1, %s19
    %p25 = scmp.ge.s32.totalorder %s24, 1
    %s26 = scalar_select %p25, 0, %s24
    %s27 = sadd.s32 1, %s18
    %s28 = scalar_select %p25, %s27, %s18
    %p29 = scmp.ge.s32.totalorder %s28, 2
    %s30 = scalar_select %p29, 0, %s28
    %s31 = ssub.s32 %s18, %s30
    %p32 = scmp.eq.s32.totalorder %s31, 0
    %s34 = sadd.s32 %s33, 1
    %s35 = scalar_select %p32, %s33, %s34
    %p38 = pneg %p32
    %p39 = scmp.eq.s32.totalorder %s11, 1
    %p40 = por %p38, %p39
    %p41 = scmp.ne.s32.totalorder %s33, %s36
    %p42 = scmp.eq.s32.totalorder %s11, 0
    %p43 = por %p41, %p42
    %p44 = scmp.ne.s32.totalorder %s33, %s36
    %p45 = scmp.eq.s32.totalorder %s16, 1
    %p46 = por %p44, %p45
    %p47 = scmp.ne.s32.totalorder %s36, %s37
    %p48 = scmp.eq.s32.totalorder %s16, 0
    %p49 = por %p47, %p48
    %p50 = scmp.ne.s32.totalorder %s36, %s37
    %p51 = scmp.eq.s32.totalorder %s17, 1
    %p52 = por %p50, %p51
    %p54 = scmp.ne.s32.totalorder %s37, %s53
    %p55 = scmp.eq.s32.totalorder %s17, 0
    %p56 = por %p54, %p55
    %s57 = ssub.s32 %s19, %s26
    %p58 = scmp.eq.s32.totalorder %s57, 0
    %s60 = sadd.s32 %s59, 1
    %s61 = scalar_select %p58, %s59, %s60
    %p64 = pneg %p58
    %p65 = scmp.eq.s32.totalorder %s11, 1
    %p66 = por %p64, %p65
    %p67 = scmp.ne.s32.totalorder %s59, %s62
    %p68 = scmp.eq.s32.totalorder %s11, 0
    %p69 = por %p67, %p68
    %p70 = scmp.ne.s32.totalorder %s59, %s62
    %p71 = scmp.eq.s32.totalorder %s16, 1
    %p72 = por %p70, %p71
    %p73 = scmp.ne.s32.totalorder %s62, %s63
    %p74 = scmp.eq.s32.totalorder %s16, 0
    %p75 = por %p73, %p74
    %p76 = scmp.ne.s32.totalorder %s62, %s63
    %p77 = scmp.eq.s32.totalorder %s17, 1
    %p78 = por %p76, %p77
    %p80 = scmp.ne.s32.totalorder %s63, %s79
    %p81 = scmp.eq.s32.totalorder %s17, 0
    %p82 = por %p80, %p81
    %s83 = ssub.s32 %s18, %s30
    %p84 = scmp.eq.s32.totalorder %s83, 0
    %s86 = sadd.s32 %s85, 1
    %s87 = scalar_select %p84, %s85, %s86
    %p90 = pneg %p84
    %p91 = scmp.eq.s32.totalorder %s11, 1
    %p92 = por %p90, %p91
    %p93 = scmp.ne.s32.totalorder %s85, %s88
    %p94 = scmp.eq.s32.totalorder %s11, 0
    %p95 = por %p93, %p94
    %p96 = scmp.ne.s32.totalorder %s85, %s88
    %p97 = scmp.eq.s32.totalorder %s16, 1
    %p98 = por %p96, %p97
    %p99 = scmp.ne.s32.totalorder %s88, %s89
    %p100 = scmp.eq.s32.totalorder %s16, 0
    %p101 = por %p99, %p100
    %p102 = scmp.ne.s32.totalorder %s88, %s89
    %p103 = scmp.eq.s32.totalorder %s17, 1
    %p104 = por %p102, %p103
    %p106 = scmp.ne.s32.totalorder %s89, %s105
    %p107 = scmp.eq.s32.totalorder %s17, 0
    %p108 = por %p106, %p107
    %s109 = ssub.s32 %s18, %s30
    %p110 = scmp.eq.s32.totalorder %s109, 0
    %s112 = sadd.s32 %s111, 1
    %s113 = scalar_select %p110, %s111, %s112
    %p116 = pneg %p110
    %p117 = scmp.eq.s32.totalorder %s11, 1
    %p118 = por %p116, %p117
    %p119 = scmp.ne.s32.totalorder %s111, %s114
    %p120 = scmp.eq.s32.totalorder %s11, 0
    %p121 = por %p119, %p120
    %p122 = scmp.ne.s32.totalorder %s111, %s114
    %p123 = scmp.eq.s32.totalorder %s16, 1
    %p124 = por %p122, %p123
    %p125 = scmp.ne.s32.totalorder %s114, %s115
    %p126 = scmp.eq.s32.totalorder %s16, 0
    %p127 = por %p125, %p126
    %p128 = scmp.ne.s32.totalorder %s114, %s115
    %p129 = scmp.eq.s32.totalorder %s17, 1
    %p130 = por %p128, %p129
    %p132 = scmp.ne.s32.totalorder %s115, %s131
    %p133 = scmp.eq.s32.totalorder %s17, 0
    %p134 = por %p132, %p133
    %s135 = ssub.s32 %s18, %s30
    %p136 = scmp.eq.s32.totalorder %s135, 0
    %s138 = sadd.s32 %s137, 1
    %s139 = scalar_select %p136, %s137, %s138
    %p142 = pneg %p136
    %p143 = scmp.eq.s32.totalorder %s11, 1
    %p144 = por %p142, %p143
    %p145 = scmp.ne.s32.totalorder %s137, %s140
    %p146 = scmp.eq.s32.totalorder %s11, 0
    %p147 = por %p145, %p146
    %p148 = scmp.ne.s32.totalorder %s137, %s140
    %p149 = scmp.eq.s32.totalorder %s16, 1
    %p150 = por %p148, %p149
    %p151 = scmp.ne.s32.totalorder %s140, %s141
    %p152 = scmp.eq.s32.totalorder %s16, 0
    %p153 = por %p151, %p152
    %p154 = scmp.ne.s32.totalorder %s140, %s141
    %p155 = scmp.eq.s32.totalorder %s17, 1
    %p156 = por %p154, %p155
    %p158 = scmp.ne.s32.totalorder %s141, %s157
    %p159 = scmp.eq.s32.totalorder %s17, 0
    %p160 = por %p158, %p159
    %p161 = scmp.le.s32.totalorder 1, %s11
    %p162 = scmp.lt.s32.totalorder %s11, 3
    %p163 = pnand %p161, %p162
    %p164 = pneg %p163
    // Predicated region
    $region9: #{_lm_loss_impl.1} parent=5 // pred_check
      _
    $region10: #{_lm_loss_impl.1} parent=5 // pred_check_branch
      %166 = sbr.rel (%p163) target = $region12
    $region11: #{_lm_loss_impl.1} parent=5 // pred_region
      %s167 = ssub.s32 %s11, 1
      // Predicated region
      $region13: #{_lm_loss_impl.1} parent=11 // pred_check
        %p168 = pneg %p75
      $region14: #{_lm_loss_impl.1} parent=11 // pred_check_branch
        %170 = sbr.rel (%p168) target = $region16
      $region15: #{_lm_loss_impl.1} parent=11 // pred_region
        %s171 = smul.u32 16, %s21
        %p172 = scmp.lt.s32.totalorder %s171, 15
        %s173 = scalar_select %p172, %s171, 15
        %s174 = smul.addr %s173, 8
        %s175 = scalar_lea.vmem %s1, %s174
        %s176 = smul.u32 16, %s21
      $region16: #{_lm_loss_impl.1} parent=11 // pred_fallthru
        _
    $region12: #{_lm_loss_impl.1} parent=5 // pred_fallthru
      _
    %p177 = scmp.lt.s32.totalorder %s11, 2
    // Predicated region
    $region17: #{_lm_loss_impl.1} parent=5 // pred_check
      %p178 = pneg %p177
    $region18: #{_lm_loss_impl.1} parent=5 // pred_check_branch
      %180 = sbr.rel (%p178) target = $region20
    $region19: #{_lm_loss_impl.1} parent=5 // pred_region
      // Predicated region
      $region21: #{_lm_loss_impl.1} parent=19 // pred_check
        %p181 = pneg %p43
      $region22: #{_lm_loss_impl.1} parent=19 // pred_check_branch
        %183 = sbr.rel (%p181) target = $region24
      $region23: #{_lm_loss_impl.1} parent=19 // pred_region
        %p184 = scmp.lt.s32.totalorder %s18, 1
        %s185 = scalar_select %p184, %s18, 1
        %s186 = smul.addr %s185, 8
        %s187 = scalar_lea.vmem %s0, %s186
      $region24: #{_lm_loss_impl.1} parent=19 // pred_fallthru
        _
      // Predicated region
      $region25: #{_lm_loss_impl.1} parent=19 // pred_check
        %p188 = pneg %p95
      $region26: #{_lm_loss_impl.1} parent=19 // pred_check_branch
        %190 = sbr.rel (%p188) target = $region28
      $region27: #{_lm_loss_impl.1} parent=19 // pred_region
        %p191 = scmp.lt.s32.totalorder %s18, 1
        %s192 = scalar_select %p191, %s18, 1
        %s193 = smul.addr %s192, 8
        %s194 = scalar_lea.vmem %s2, %s193
      $region28: #{_lm_loss_impl.1} parent=19 // pred_fallthru
        _
    $region20: #{_lm_loss_impl.1} parent=5 // pred_fallthru
      _
    %p195 = scmp.le.s32.totalorder 1, %s11
    %p196 = scmp.lt.s32.totalorder %s11, 3
    %p197 = pnand %p195, %p196
    %p198 = pneg %p197
    // Predicated region
    $region29: #{_lm_loss_impl.1} parent=5 // pred_check
      _
    $region30: #{_lm_loss_impl.1} parent=5 // pred_check_branch
      %200 = sbr.rel (%p197) target = $region32
    $region31: #{_lm_loss_impl.1} parent=5 // pred_region
      %s201 = ssub.s32 %s11, 1
      %p202 = scmp.lt.s32.totalorder %s20, 1
      %s203 = scalar_select %p202, %s20, 1
      %s204 = smul.addr %s203, 8
      %s205 = scalar_lea.vmem %s0, %s204
      %p206 = pneg %p49
      %p207 = pneg %p46
      %s208 = smul.u32 16, %s21
      %p209 = scmp.lt.s32.totalorder %s208, 15
      %s210 = scalar_select %p209, %s208, 15
      %s211 = smul.addr %s210, 8
      %s212 = scalar_lea.vmem %s1, %s211
      %p213 = pneg %p75
      %p214 = pneg %p72
      %p215 = scmp.lt.s32.totalorder %s20, 1
      %s216 = scalar_select %p215, %s20, 1
      %s217 = smul.addr %s216, 8
      %s218 = scalar_lea.vmem %s2, %s217
      %p219 = pneg %p101
      %p220 = pneg %p98
      %p221 = pneg %p127
      %p222 = pneg %p124
      %p223 = scmp.lt.s32.totalorder %s20, 1
      %s224 = scalar_select %p223, %s20, 1
      %s225 = smul.addr %s224, 8
      %s226 = scalar_lea.vmem %s3, %s225
      %p227 = pneg %p153
      %p228 = pneg %p150
      %p229 = scmp.lt.s32.totalorder %s20, 1
      %s230 = scalar_select %p229, %s20, 1
      %s231 = smul.addr %s230, 8
      %s232 = scalar_lea.vmem %s4, %s231
      %p233 = scmp.lt.s32.totalorder %s20, 1
      %s234 = scalar_select %p233, %s20, 1
      %s235 = smul.addr %s234, 8
      %s236 = scalar_lea.vmem %s0, %s235
      %s237 = smul.u32 16, %s21
      %p238 = scmp.lt.s32.totalorder %s237, 15
      %s239 = scalar_select %p238, %s237, 15
      %s240 = smul.addr %s239, 8
      %s241 = scalar_lea.vmem %s1, %s240
      %s242 = smul.u32 16, %s21
      %p243 = scmp.lt.s32.totalorder %s20, 1
      %s244 = scalar_select %p243, %s20, 1
      %s245 = smul.addr %s244, 8
      %s246 = scalar_lea.vmem %s2, %s245
      %p247 = scmp.lt.s32.totalorder %s20, 1
      %s248 = scalar_select %p247, %s20, 1
      %s249 = smul.addr %s248, 8
      %s250 = scalar_lea.vmem %s3, %s249
      %p251 = scmp.lt.s32.totalorder %s20, 1
      %s252 = scalar_select %p251, %s20, 1
      %s253 = smul.addr %s252, 8
      %s254 = scalar_lea.vmem %s4, %s253
      %p255 = scmp.eq.s32.totalorder %s21, 0
      // Predicated region
      $region33: #{_lm_loss_impl.1} parent=31 // pred_check
        %p256 = pneg %p255
      $region34: #{_lm_loss_impl.1} parent=31 // pred_check_branch
        %258 = sbr.rel (%p256) target = $region36
      $region35: #{_lm_loss_impl.1} parent=31 // pred_region
        %vm259 = vcmask 7168
        %260 = vst.msk [vmem:[#allocation2] sm:$0xff] %vm259, -inf
        %261 = vst.msk [vmem:[#allocation3] sm:$0xff] %vm259, 0.0
        %262 = vst.msk [vmem:[#allocation4] sm:$0xff] %vm259, 0.0
      $region36: #{_lm_loss_impl.1} parent=31 // pred_fallthru
        _
      %v263 = vld [vmem:[%s236] sm:$0xff]
      %v264 = vld [vmem:[%s241] sm:$0xff]
      %v265 = vld [vmem:[%s241 + $0x8] sm:$0xff]
      %v266 = vld [vmem:[%s241 + $0x10] sm:$0xff]
      %v267 = vld [vmem:[%s241 + $0x18] sm:$0xff]
      %v268 = vld [vmem:[%s241 + $0x20] sm:$0xff]
      %v269 = vld [vmem:[%s241 + $0x28] sm:$0xff]
      %v270 = vld [vmem:[%s241 + $0x30] sm:$0xff]
      %v271 = vld [vmem:[%s241 + $0x38] sm:$0xff]
      %v272 = vld [vmem:[%s241 + $0x40] sm:$0xff]
      %v273 = vld [vmem:[%s241 + $0x48] sm:$0xff]
      %v274 = vld [vmem:[%s241 + $0x50] sm:$0xff]
      %v275 = vld [vmem:[%s241 + $0x58] sm:$0xff]
      %v276 = vld [vmem:[%s241 + $0x60] sm:$0xff]
      %v277 = vld [vmem:[%s241 + $0x68] sm:$0xff]
      %v278 = vld [vmem:[%s241 + $0x70] sm:$0xff]
      %v279 = vld [vmem:[%s241 + $0x78] sm:$0xff]
      %vm280 = vcmask 261120
      %v282 = vsel %vm280, %v263, 0
      %v285 = vsel %vm280, %v264, 0
      %v288 = vsel %vm280, %v265, 0
      %v291 = vsel %vm280, %v266, 0
      %v294 = vsel %vm280, %v267, 0
      %v297 = vsel %vm280, %v268, 0
      %v300 = vsel %vm280, %v269, 0
      %v303 = vsel %vm280, %v270, 0
      %v306 = vsel %vm280, %v271, 0
      %v309 = vsel %vm280, %v272, 0
      %v312 = vsel %vm280, %v273, 0
      %v315 = vsel %vm280, %v274, 0
      %v318 = vsel %vm280, %v275, 0
      %v321 = vsel %vm280, %v276, 0
      %v324 = vsel %vm280, %v277, 0
      %v327 = vsel %vm280, %v278, 0
      %v330 = vsel %vm280, %v279, 0
      %332 = vmatprep.subr.mxu0 0.0
      %333 = vmatpush1.xpose.msra.mxu0 %v285
      %334 = vmatprep.subr.mxu0 0.0
      %335 = vmatpush1.xpose.msra.mxu0 %v288
      %336 = vmatprep.subr.mxu0 0.0
      %337 = vmatpush1.xpose.msra.mxu0 %v291
      %338 = vmatprep.subr.mxu0 0.0
      %339 = vmatpush1.xpose.msra.mxu0 %v294
      %340 = vmatprep.subr.mxu0 0.0
      %341 = vmatpush1.xpose.msra.mxu0 %v297
      %342 = vmatprep.subr.mxu0 0.0
      %343 = vmatpush1.xpose.msra.mxu0 %v300
      %344 = vmatprep.subr.mxu0 0.0
      %345 = vmatpush1.xpose.msra.mxu0 %v303
      %346 = vmatprep.subr.mxu0 0.0
      %347 = vmatpush1.xpose.msra.mxu0 %v306
      %348 = vmatprep.subr.mxu0 0.0
      %349 = vmatpush1.xpose.msra.mxu0 %v309
      %350 = vmatprep.subr.mxu0 0.0
      %351 = vmatpush1.xpose.msra.mxu0 %v312
      %352 = vmatprep.subr.mxu0 0.0
      %353 = vmatpush1.xpose.msra.mxu0 %v315
      %354 = vmatprep.subr.mxu0 0.0
      %355 = vmatpush1.xpose.msra.mxu0 %v318
      %356 = vmatprep.subr.mxu0 0.0
      %357 = vmatpush1.xpose.msra.mxu0 %v321
      %358 = vmatprep.subr.mxu0 0.0
      %359 = vmatpush1.xpose.msra.mxu0 %v324
      %360 = vmatprep.subr.mxu0 0.0
      %361 = vmatpush1.xpose.msra.mxu0 %v327
      %362 = vmatprep.subr.mxu0 0.0
      %363 = vmatpush1.xpose.msra.mxu0 %v330
      %364 = vmatprep.subr.mxu0 0.0
      %365 = vmatpush1.xpose.msra.mxu0 0.0
      %366 = vmatprep.subr.mxu0 0.0
      %367 = vmatpush1.xpose.msra.mxu0 0.0
      %368 = vmatprep.subr.mxu0 0.0
      %369 = vmatpush1.xpose.msra.mxu0 0.0
      %370 = vmatprep.subr.mxu0 0.0
      %371 = vmatpush1.xpose.msra.mxu0 0.0
      %372 = vmatprep.subr.mxu0 0.0
      %373 = vmatpush1.xpose.msra.mxu0 0.0
      %374 = vmatprep.subr.mxu0 0.0
      %375 = vmatpush1.xpose.msra.mxu0 0.0
      %376 = vmatprep.subr.mxu0 0.0
      %377 = vmatpush1.xpose.msra.mxu0 0.0
      %378 = vmatprep.subr.mxu0 0.0
      %379 = vmatpush1.xpose.msra.mxu0 0.0
      %380 = vmatprep.subr.mxu0 0.0
      %381 = vmatpush1.xpose.msra.mxu0 0.0
      %382 = vmatprep.subr.mxu0 0.0
      %383 = vmatpush1.xpose.msra.mxu0 0.0
      %384 = vmatprep.subr.mxu0 0.0
      %385 = vmatpush1.xpose.msra.mxu0 0.0
      %386 = vmatprep.subr.mxu0 0.0
      %387 = vmatpush1.xpose.msra.mxu0 0.0
      %388 = vmatprep.subr.mxu0 0.0
      %389 = vmatpush1.xpose.msra.mxu0 0.0
      %390 = vmatprep.subr.mxu0 0.0
      %391 = vmatpush1.xpose.msra.mxu0 0.0
      %392 = vmatprep.subr.mxu0 0.0
      %393 = vmatpush1.xpose.msra.mxu0 0.0
      %394 = vmatprep.subr.mxu0 0.0
      %395 = vmatpush1.xpose.msra.mxu0 0.0
      %396 = vmatprep.mubr.f32.mxu0 0.0
      %397 = vmatmul.mubr.f32.gmra.mrb[0].mxu0 %v282
      %v398 = vpop.f32.mrb[0].mxu0
      %v399 = vadd.f32 0.0, %v398
      %v400 = vpop.f32.mrb[0].mxu0
      %401 = vdwg.mxu0
      %v402 = vlaneseq
      %v403 = vand.u32 %v402, 127
      %v404 = vld [vmem:[#allocation2] sm:$0xff]
      %405 = vmax.xlane.f32.xlu0 %v399
      %v406 = vpop.xlane.xlu0 %405
      %v407 = vmax.f32 %v404, %v406
      %v408 = vsub.f32 %v404, %v407
      %v409 = vmul.f32 %v408, 1.442695
      %v410 = vpow.pop %v409
      %v411 = vld [vmem:[#allocation3] sm:$0xff]
      %v412 = vmul.f32 %v410, %v411
      %414 = vset.pattern.permute.xlu0 0
      %415 = vperm.xlu0 %414, %v407
      %v416 = vpop.permute.xlu0 %415
      %v418 = vsub.f32 %v399, %v416
      %v419 = vmul.f32 %v418, 1.442695
      %v420 = vpow.pop %v419
      %421 = vadd.xlane.f32.xlu0 %v420
      %v422 = vpop.xlane.xlu0 %421
      %v423 = vadd.f32 %v412, %v422
      %vm424 = vcmask 7168
      %425 = vst.msk [vmem:[#allocation3] sm:$0xff] %vm424, %v423
      %426 = vst.msk [vmem:[#allocation2] sm:$0xff] %vm424, %v407
      %v427 = vld [vmem:[%s246] sm:$0xff]
      %s428 = smul.u32 %s21, 128
      %v429 = vstv %s428
      %v430 = vsub.s32 %v427, %v429
      %431 = vset.pattern.permute.xlu0 0
      %432 = vperm.xlu0 %431, %v430
      %v433 = vpop.permute.xlu0 %432
      %vm434 = vcmp.eq.s32.totalorder %v403, %v433
      %v435 = vld [vmem:[#allocation4] sm:$0xff]
      %v436 = vsel %vm434, %v399, 0.0
      %437 = vadd.xlane.f32.xlu0 %v436
      %v438 = vpop.xlane.xlu0 %437
      %v439 = vadd.f32 %v435, %v438
      %440 = vst.msk [vmem:[#allocation4] sm:$0xff] %vm424, %v439
      // Predicated region
      $region37: #{_lm_loss_impl.1} parent=31 // pred_check
        %p441 = pneg %p255
      $region38: #{_lm_loss_impl.1} parent=31 // pred_check_branch
        %443 = sbr.rel (%p441) target = $region40
      $region39: #{_lm_loss_impl.1} parent=31 // pred_region
        %vm444 = vcmp.ne.s32.totalorder %v427, 4294967196
        %v445 = vld [vmem:[#allocation2] sm:$0xff]
        %v446 = vld [vmem:[#allocation3] sm:$0xff]
        %v447 = vlog2.pop %v446
        %v448 = vmul.f32 %v447, 0.6931472
        %v449 = vadd.f32 %v445, %v448
        %v450 = vld [vmem:[#allocation4] sm:$0xff]
        %v451 = vsub.f32 %v449, %v450
        %v452 = vsel %vm444, %v451, 0.0
        %453 = vst.msk [vmem:[%s250] sm:$0xff] %vm424, %v452
        %v454 = vsel %vm444, 1, 0
        %v455 = vcvt.s32.f32 %v454
        %456 = vst.msk [vmem:[%s254] sm:$0xff] %vm424, %v455
      $region40: #{_lm_loss_impl.1} parent=31 // pred_fallthru
        _
      %p457 = scmp.lt.s32.totalorder %s20, 1
      %s458 = scalar_select %p457, %s20, 1
      %s459 = smul.addr %s458, 8
      %s460 = scalar_lea.vmem %s3, %s459
      %p461 = scmp.lt.s32.totalorder %s20, 1
      %s462 = scalar_select %p461, %s20, 1
      %s463 = smul.addr %s462, 8
      %s464 = scalar_lea.vmem %s4, %s463
      // Predicated region
      $region41: #{_lm_loss_impl.1} parent=31 // pred_check
        %p465 = pneg %p124
      $region42: #{_lm_loss_impl.1} parent=31 // pred_check_branch
        %467 = sbr.rel (%p465) target = $region44
      $region43: #{_lm_loss_impl.1} parent=31 // pred_region
        _
      $region44: #{_lm_loss_impl.1} parent=31 // pred_fallthru
        _
      // Predicated region
      $region45: #{_lm_loss_impl.1} parent=31 // pred_check
        %p468 = pneg %p150
      $region46: #{_lm_loss_impl.1} parent=31 // pred_check_branch
        %470 = sbr.rel (%p468) target = $region48
      $region47: #{_lm_loss_impl.1} parent=31 // pred_region
        _
      $region48: #{_lm_loss_impl.1} parent=31 // pred_fallthru
        _
    $region32: #{_lm_loss_impl.1} parent=5 // pred_fallthru
      _
    %p471 = scmp.le.s32.totalorder 2, %s11
    // Predicated region
    $region49: #{_lm_loss_impl.1} parent=5 // pred_check
      %p472 = pneg %p471
    $region50: #{_lm_loss_impl.1} parent=5 // pred_check_branch
      %474 = sbr.rel (%p472) target = $region52
    $region51: #{_lm_loss_impl.1} parent=5 // pred_region
      %s475 = ssub.s32 %s11, 2
      // Predicated region
      $region53: #{_lm_loss_impl.1} parent=51 // pred_check
        %p476 = pneg %p130
      $region54: #{_lm_loss_impl.1} parent=51 // pred_check_branch
        %478 = sbr.rel (%p476) target = $region56
      $region55: #{_lm_loss_impl.1} parent=51 // pred_region
        %p479 = scmp.lt.s32.totalorder %s22, 1
        %s480 = scalar_select %p479, %s22, 1
        %s481 = smul.addr %s480, 8
        %s482 = scalar_lea.vmem %s3, %s481
      $region56: #{_lm_loss_impl.1} parent=51 // pred_fallthru
        _
      // Predicated region
      $region57: #{_lm_loss_impl.1} parent=51 // pred_check
        %p483 = pneg %p156
      $region58: #{_lm_loss_impl.1} parent=51 // pred_check_branch
        %485 = sbr.rel (%p483) target = $region60
      $region59: #{_lm_loss_impl.1} parent=51 // pred_region
        %p486 = scmp.lt.s32.totalorder %s22, 1
        %s487 = scalar_select %p486, %s22, 1
        %s488 = smul.addr %s487, 8
        %s489 = scalar_lea.vmem %s4, %s488
      $region60: #{_lm_loss_impl.1} parent=51 // pred_fallthru
        _
    $region52: #{_lm_loss_impl.1} parent=5 // pred_fallthru
      _
  $region6: #{_lm_loss_impl.1} parent=0 // loop_footer
    %s15 = sadd.s32 1, %s11
  $region7: #{_lm_loss_impl.1} parent=0 // loop_footer_branch
    %10 = sbr.rel target = $region3
  $region8: #{_lm_loss_impl.1} parent=0 // loop_exit
    _

</llo_original>
